<compile_context>
chip_gen: v6e
topology: v6e:2x2x1
jax: 0.10.0
libtpu: 0.0.40
codegen_flags: <defaults>
</compile_context>

<pallas_src>
import math

import jax
import jax.numpy as jnp
from jax.experimental import pallas as pl
from jax.experimental.pallas import tpu as pltpu

MAX_BLOCK_ROWS = 1024  # 128-lane rows per channel per grid step (multiple of 8)
_LN2 = math.log(2.0)


def _softplus(x):
    # matches torch.nn.Softplus(beta=1, threshold=20)
    return jnp.where(x > 20.0, x, jnp.log1p(jnp.exp(jnp.minimum(x, 20.0))))


def _meta_loss_kernel(w1_ref, w2_ref, w3_ref, w4_ref, p_ref, y_ref, out_ref):
    # p_ref / y_ref: (R, 128) sublane+lane dense tiles, one per input channel.
    xin = [p_ref[...], y_ref[...]]

    def layer(inputs, w_ref, n_out, n_in, relu=True):
        outs = []
        for j in range(n_out):
            h = w_ref[j, 0] * inputs[0]
            for i in range(1, n_in):
                h = h + w_ref[j, i] * inputs[i]
            outs.append(jnp.maximum(h, 0.0) if relu else h)
        return outs

    h = layer(xin, w1_ref, 4, 2)            # Conv3d(2,4,1) + ReLU
    h = layer(h, w2_ref, 3, 4)              # Conv3d(4,3,1) + ReLU
    h = layer(h, w3_ref, 2, 3)              # Conv3d(3,2,1) + ReLU
    h = layer(h, w4_ref, 1, 2, relu=False)[0]  # Conv3d(2,1,1)

    sp = _softplus(h)                       # (R, 128)

    # Fold the R rows down to an (8, 128) per-block partial sum with pure
    # sublane-aligned VPU adds (no per-step full XLU reduce, no scalar RMW).
    r = sp.shape[0]
    folded = sp[0:8, :]
    for k in range(1, r // 8):
        folded = folded + sp[k * 8:(k + 1) * 8, :]
    out_ref[...] = folded


def meta_loss_3d(pred, y, weights):
    """pred, y: (N, 1, D, H, W). weights: (w1, w2, w3, w4). Returns scalar mean loss."""
    w1, w2, w3, w4 = (w.astype(jnp.float32) for w in weights)

    p_flat = pred.astype(jnp.float32).reshape(-1)
    y_flat = y.astype(jnp.float32).reshape(-1)
    p_total = p_flat.shape[0]

    rows = pl.cdiv(p_total, 128)
    block_rows = min(MAX_BLOCK_ROWS, ((rows + 7) // 8) * 8)
    rows_padded = pl.cdiv(rows, block_rows) * block_rows
    p_padded = rows_padded * 128
    pad_count = p_padded - p_total
    if pad_count:
        p_flat = jnp.pad(p_flat, (0, pad_count))
        y_flat = jnp.pad(y_flat, (0, pad_count))

    xp = p_flat.reshape(rows_padded, 128)
    xq = y_flat.reshape(rows_padded, 128)
    num_blocks = rows_padded // block_rows

    smem_spec = pl.BlockSpec(memory_space=pltpu.SMEM)
    data_spec = pl.BlockSpec((block_rows, 128), lambda i: (i, 0))

    partials = pl.pallas_call(
        _meta_loss_kernel,
        out_shape=jax.ShapeDtypeStruct((num_blocks * 8, 128), jnp.float32),
        grid_spec=pltpu.PrefetchScalarGridSpec(
            num_scalar_prefetch=0,
            grid=(num_blocks,),
            in_specs=[smem_spec, smem_spec, smem_spec, smem_spec,
                      data_spec, data_spec],
            out_specs=pl.BlockSpec((8, 128), lambda i: (i, 0)),
        ),
        compiler_params=pltpu.CompilerParams(
            dimension_semantics=("parallel",),
            vmem_limit_bytes=32 * 1024 * 1024),
    )(w1, w2, w3, w4, xp, xq)

    # Tiny final reduction + analytic correction for zero-padded voxels
    # (valid because every conv layer has bias=False -> softplus(0) = ln 2).
    total = jnp.sum(partials) - jnp.float32(pad_count) * jnp.float32(_LN2)
    return total / jnp.float32(p_total)


def _xavier_uniform(key, shape):
    # Conv3d with 1x1x1 kernel: fan_in = in_ch, fan_out = out_ch
    fan_out, fan_in = shape
    a = math.sqrt(6.0 / (fan_in + fan_out))
    return jax.random.uniform(key, shape, jnp.float32, minval=-a, maxval=a)


def _reference(pred, y, weights):
    w1, w2, w3, w4 = weights
    x = jnp.concatenate([pred, y], axis=1)               # (N, 2, D, H, W)
    xf = jnp.moveaxis(x, 1, -1)                          # (N, D, H, W, 2)
    h = jnp.maximum(xf @ w1.T, 0.0)
    h = jnp.maximum(h @ w2.T, 0.0)
    h = jnp.maximum(h @ w3.T, 0.0)
    h = h @ w4.T
    return jnp.mean(_softplus(h))


if __name__ == "__main__":
    key = jax.random.PRNGKey(0)
    k1, k2, k3, k4, kp, ky = jax.random.split(key, 6)

    # deterministic xavier-uniform weights for the 4 pointwise Conv3d layers
    weights = (_xavier_uniform(k1, (4, 2)),
               _xavier_uniform(k2, (3, 4)),
               _xavier_uniform(k3, (2, 3)),
               _xavier_uniform(k4, (1, 2)))

    # small shapes: N=2, C=1 each, D=4, H=8, W=16  ->  P = 1024 voxels
    pred = jax.random.normal(kp, (2, 1, 4, 8, 16), jnp.float32)
    y = jax.random.normal(ky, (2, 1, 4, 8, 16), jnp.float32)

    out = meta_loss_3d(pred, y, weights)
    jax.block_until_ready(out)

    ref = _reference(pred, y, weights)
    assert jnp.allclose(out, ref, rtol=1e-5, atol=1e-6), (out, ref)

    print("KERNEL_OK")
</pallas_src>

<mosaic_0001>
module attributes {stable_mosaic.version = 11 : i64} {
  func.func @_meta_loss_kernel(%arg0: i32, %arg1: memref<4x2xf32, #tpu.memory_space<smem>>, %arg2: memref<3x4xf32, #tpu.memory_space<smem>>, %arg3: memref<2x3xf32, #tpu.memory_space<smem>>, %arg4: memref<1x2xf32, #tpu.memory_space<smem>>, %arg5: memref<8x128xf32, #tpu.memory_space<vmem>>, %arg6: memref<8x128xf32, #tpu.memory_space<vmem>>, %arg7: memref<8x128xf32, #tpu.memory_space<vmem>>) attributes {dimension_semantics = [#tpu.dimension_semantics<parallel>], iteration_bounds = array<i64: 1>, scalar_prefetch = 0 : i64, scratch_operands = 0 : i64, tpu.core_type = #tpu.core_type<tc>, window_params = [{transform_indices = @transform_0, window_bounds = array<i64: 4, 2>}, {transform_indices = @transform_1, window_bounds = array<i64: 3, 4>}, {transform_indices = @transform_2, window_bounds = array<i64: 2, 3>}, {transform_indices = @transform_3, window_bounds = array<i64: 1, 2>}, {transform_indices = @transform_4, window_bounds = array<i64: 8, 128>}, {transform_indices = @transform_5, window_bounds = array<i64: 8, 128>}, {transform_indices = @transform_6, window_bounds = array<i64: 8, 128>}]} {
    %c0 = arith.constant 0 : index
    %c0_0 = arith.constant 0 : index
    %0 = vector.load %arg5[%c0, %c0_0] : memref<8x128xf32, #tpu.memory_space<vmem>>, vector<8x128xf32>
    %c0_1 = arith.constant 0 : index
    %c0_2 = arith.constant 0 : index
    %1 = vector.load %arg6[%c0_1, %c0_2] : memref<8x128xf32, #tpu.memory_space<vmem>>, vector<8x128xf32>
    %c0_3 = arith.constant 0 : index
    %c0_4 = arith.constant 0 : index
    %2 = memref.load %arg1[%c0_3, %c0_4] : memref<4x2xf32, #tpu.memory_space<smem>>
    %3 = vector.broadcast %2 : f32 to vector<8x128xf32>
    %4 = arith.mulf %3, %0 : vector<8x128xf32>
    %c0_5 = arith.constant 0 : index
    %c1 = arith.constant 1 : index
    %5 = memref.load %arg1[%c0_5, %c1] : memref<4x2xf32, #tpu.memory_space<smem>>
    %6 = vector.broadcast %5 : f32 to vector<8x128xf32>
    %7 = arith.mulf %6, %1 : vector<8x128xf32>
    %8 = arith.addf %4, %7 : vector<8x128xf32>
    %cst = arith.constant 0.000000e+00 : f32
    %9 = vector.broadcast %cst : f32 to vector<8x128xf32>
    %10 = arith.maximumf %8, %9 : vector<8x128xf32>
    %c1_6 = arith.constant 1 : index
    %c0_7 = arith.constant 0 : index
    %11 = memref.load %arg1[%c1_6, %c0_7] : memref<4x2xf32, #tpu.memory_space<smem>>
    %12 = vector.broadcast %11 : f32 to vector<8x128xf32>
    %13 = arith.mulf %12, %0 : vector<8x128xf32>
    %c1_8 = arith.constant 1 : index
    %c1_9 = arith.constant 1 : index
    %14 = memref.load %arg1[%c1_8, %c1_9] : memref<4x2xf32, #tpu.memory_space<smem>>
    %15 = vector.broadcast %14 : f32 to vector<8x128xf32>
    %16 = arith.mulf %15, %1 : vector<8x128xf32>
    %17 = arith.addf %13, %16 : vector<8x128xf32>
    %cst_10 = arith.constant 0.000000e+00 : f32
    %18 = vector.broadcast %cst_10 : f32 to vector<8x128xf32>
    %19 = arith.maximumf %17, %18 : vector<8x128xf32>
    %c2 = arith.constant 2 : index
    %c0_11 = arith.constant 0 : index
    %20 = memref.load %arg1[%c2, %c0_11] : memref<4x2xf32, #tpu.memory_space<smem>>
    %21 = vector.broadcast %20 : f32 to vector<8x128xf32>
    %22 = arith.mulf %21, %0 : vector<8x128xf32>
    %c2_12 = arith.constant 2 : index
    %c1_13 = arith.constant 1 : index
    %23 = memref.load %arg1[%c2_12, %c1_13] : memref<4x2xf32, #tpu.memory_space<smem>>
    %24 = vector.broadcast %23 : f32 to vector<8x128xf32>
    %25 = arith.mulf %24, %1 : vector<8x128xf32>
    %26 = arith.addf %22, %25 : vector<8x128xf32>
    %cst_14 = arith.constant 0.000000e+00 : f32
    %27 = vector.broadcast %cst_14 : f32 to vector<8x128xf32>
    %28 = arith.maximumf %26, %27 : vector<8x128xf32>
    %c3 = arith.constant 3 : index
    %c0_15 = arith.constant 0 : index
    %29 = memref.load %arg1[%c3, %c0_15] : memref<4x2xf32, #tpu.memory_space<smem>>
    %30 = vector.broadcast %29 : f32 to vector<8x128xf32>
    %31 = arith.mulf %30, %0 : vector<8x128xf32>
    %c3_16 = arith.constant 3 : index
    %c1_17 = arith.constant 1 : index
    %32 = memref.load %arg1[%c3_16, %c1_17] : memref<4x2xf32, #tpu.memory_space<smem>>
    %33 = vector.broadcast %32 : f32 to vector<8x128xf32>
    %34 = arith.mulf %33, %1 : vector<8x128xf32>
    %35 = arith.addf %31, %34 : vector<8x128xf32>
    %cst_18 = arith.constant 0.000000e+00 : f32
    %36 = vector.broadcast %cst_18 : f32 to vector<8x128xf32>
    %37 = arith.maximumf %35, %36 : vector<8x128xf32>
    %c0_19 = arith.constant 0 : index
    %c0_20 = arith.constant 0 : index
    %38 = memref.load %arg2[%c0_19, %c0_20] : memref<3x4xf32, #tpu.memory_space<smem>>
    %39 = vector.broadcast %38 : f32 to vector<8x128xf32>
    %40 = arith.mulf %39, %10 : vector<8x128xf32>
    %c0_21 = arith.constant 0 : index
    %c1_22 = arith.constant 1 : index
    %41 = memref.load %arg2[%c0_21, %c1_22] : memref<3x4xf32, #tpu.memory_space<smem>>
    %42 = vector.broadcast %41 : f32 to vector<8x128xf32>
    %43 = arith.mulf %42, %19 : vector<8x128xf32>
    %44 = arith.addf %40, %43 : vector<8x128xf32>
    %c0_23 = arith.constant 0 : index
    %c2_24 = arith.constant 2 : index
    %45 = memref.load %arg2[%c0_23, %c2_24] : memref<3x4xf32, #tpu.memory_space<smem>>
    %46 = vector.broadcast %45 : f32 to vector<8x128xf32>
    %47 = arith.mulf %46, %28 : vector<8x128xf32>
    %48 = arith.addf %44, %47 : vector<8x128xf32>
    %c0_25 = arith.constant 0 : index
    %c3_26 = arith.constant 3 : index
    %49 = memref.load %arg2[%c0_25, %c3_26] : memref<3x4xf32, #tpu.memory_space<smem>>
    %50 = vector.broadcast %49 : f32 to vector<8x128xf32>
    %51 = arith.mulf %50, %37 : vector<8x128xf32>
    %52 = arith.addf %48, %51 : vector<8x128xf32>
    %cst_27 = arith.constant 0.000000e+00 : f32
    %53 = vector.broadcast %cst_27 : f32 to vector<8x128xf32>
    %54 = arith.maximumf %52, %53 : vector<8x128xf32>
    %c1_28 = arith.constant 1 : index
    %c0_29 = arith.constant 0 : index
    %55 = memref.load %arg2[%c1_28, %c0_29] : memref<3x4xf32, #tpu.memory_space<smem>>
    %56 = vector.broadcast %55 : f32 to vector<8x128xf32>
    %57 = arith.mulf %56, %10 : vector<8x128xf32>
    %c1_30 = arith.constant 1 : index
    %c1_31 = arith.constant 1 : index
    %58 = memref.load %arg2[%c1_30, %c1_31] : memref<3x4xf32, #tpu.memory_space<smem>>
    %59 = vector.broadcast %58 : f32 to vector<8x128xf32>
    %60 = arith.mulf %59, %19 : vector<8x128xf32>
    %61 = arith.addf %57, %60 : vector<8x128xf32>
    %c1_32 = arith.constant 1 : index
    %c2_33 = arith.constant 2 : index
    %62 = memref.load %arg2[%c1_32, %c2_33] : memref<3x4xf32, #tpu.memory_space<smem>>
    %63 = vector.broadcast %62 : f32 to vector<8x128xf32>
    %64 = arith.mulf %63, %28 : vector<8x128xf32>
    %65 = arith.addf %61, %64 : vector<8x128xf32>
    %c1_34 = arith.constant 1 : index
    %c3_35 = arith.constant 3 : index
    %66 = memref.load %arg2[%c1_34, %c3_35] : memref<3x4xf32, #tpu.memory_space<smem>>
    %67 = vector.broadcast %66 : f32 to vector<8x128xf32>
    %68 = arith.mulf %67, %37 : vector<8x128xf32>
    %69 = arith.addf %65, %68 : vector<8x128xf32>
    %cst_36 = arith.constant 0.000000e+00 : f32
    %70 = vector.broadcast %cst_36 : f32 to vector<8x128xf32>
    %71 = arith.maximumf %69, %70 : vector<8x128xf32>
    %c2_37 = arith.constant 2 : index
    %c0_38 = arith.constant 0 : index
    %72 = memref.load %arg2[%c2_37, %c0_38] : memref<3x4xf32, #tpu.memory_space<smem>>
    %73 = vector.broadcast %72 : f32 to vector<8x128xf32>
    %74 = arith.mulf %73, %10 : vector<8x128xf32>
    %c2_39 = arith.constant 2 : index
    %c1_40 = arith.constant 1 : index
    %75 = memref.load %arg2[%c2_39, %c1_40] : memref<3x4xf32, #tpu.memory_space<smem>>
    %76 = vector.broadcast %75 : f32 to vector<8x128xf32>
    %77 = arith.mulf %76, %19 : vector<8x128xf32>
    %78 = arith.addf %74, %77 : vector<8x128xf32>
    %c2_41 = arith.constant 2 : index
    %c2_42 = arith.constant 2 : index
    %79 = memref.load %arg2[%c2_41, %c2_42] : memref<3x4xf32, #tpu.memory_space<smem>>
    %80 = vector.broadcast %79 : f32 to vector<8x128xf32>
    %81 = arith.mulf %80, %28 : vector<8x128xf32>
    %82 = arith.addf %78, %81 : vector<8x128xf32>
    %c2_43 = arith.constant 2 : index
    %c3_44 = arith.constant 3 : index
    %83 = memref.load %arg2[%c2_43, %c3_44] : memref<3x4xf32, #tpu.memory_space<smem>>
    %84 = vector.broadcast %83 : f32 to vector<8x128xf32>
    %85 = arith.mulf %84, %37 : vector<8x128xf32>
    %86 = arith.addf %82, %85 : vector<8x128xf32>
    %cst_45 = arith.constant 0.000000e+00 : f32
    %87 = vector.broadcast %cst_45 : f32 to vector<8x128xf32>
    %88 = arith.maximumf %86, %87 : vector<8x128xf32>
    %c0_46 = arith.constant 0 : index
    %c0_47 = arith.constant 0 : index
    %89 = memref.load %arg3[%c0_46, %c0_47] : memref<2x3xf32, #tpu.memory_space<smem>>
    %90 = vector.broadcast %89 : f32 to vector<8x128xf32>
    %91 = arith.mulf %90, %54 : vector<8x128xf32>
    %c0_48 = arith.constant 0 : index
    %c1_49 = arith.constant 1 : index
    %92 = memref.load %arg3[%c0_48, %c1_49] : memref<2x3xf32, #tpu.memory_space<smem>>
    %93 = vector.broadcast %92 : f32 to vector<8x128xf32>
    %94 = arith.mulf %93, %71 : vector<8x128xf32>
    %95 = arith.addf %91, %94 : vector<8x128xf32>
    %c0_50 = arith.constant 0 : index
    %c2_51 = arith.constant 2 : index
    %96 = memref.load %arg3[%c0_50, %c2_51] : memref<2x3xf32, #tpu.memory_space<smem>>
    %97 = vector.broadcast %96 : f32 to vector<8x128xf32>
    %98 = arith.mulf %97, %88 : vector<8x128xf32>
    %99 = arith.addf %95, %98 : vector<8x128xf32>
    %cst_52 = arith.constant 0.000000e+00 : f32
    %100 = vector.broadcast %cst_52 : f32 to vector<8x128xf32>
    %101 = arith.maximumf %99, %100 : vector<8x128xf32>
    %c1_53 = arith.constant 1 : index
    %c0_54 = arith.constant 0 : index
    %102 = memref.load %arg3[%c1_53, %c0_54] : memref<2x3xf32, #tpu.memory_space<smem>>
    %103 = vector.broadcast %102 : f32 to vector<8x128xf32>
    %104 = arith.mulf %103, %54 : vector<8x128xf32>
    %c1_55 = arith.constant 1 : index
    %c1_56 = arith.constant 1 : index
    %105 = memref.load %arg3[%c1_55, %c1_56] : memref<2x3xf32, #tpu.memory_space<smem>>
    %106 = vector.broadcast %105 : f32 to vector<8x128xf32>
    %107 = arith.mulf %106, %71 : vector<8x128xf32>
    %108 = arith.addf %104, %107 : vector<8x128xf32>
    %c1_57 = arith.constant 1 : index
    %c2_58 = arith.constant 2 : index
    %109 = memref.load %arg3[%c1_57, %c2_58] : memref<2x3xf32, #tpu.memory_space<smem>>
    %110 = vector.broadcast %109 : f32 to vector<8x128xf32>
    %111 = arith.mulf %110, %88 : vector<8x128xf32>
    %112 = arith.addf %108, %111 : vector<8x128xf32>
    %cst_59 = arith.constant 0.000000e+00 : f32
    %113 = vector.broadcast %cst_59 : f32 to vector<8x128xf32>
    %114 = arith.maximumf %112, %113 : vector<8x128xf32>
    %c0_60 = arith.constant 0 : index
    %c0_61 = arith.constant 0 : index
    %115 = memref.load %arg4[%c0_60, %c0_61] : memref<1x2xf32, #tpu.memory_space<smem>>
    %116 = vector.broadcast %115 : f32 to vector<8x128xf32>
    %117 = arith.mulf %116, %101 : vector<8x128xf32>
    %c0_62 = arith.constant 0 : index
    %c1_63 = arith.constant 1 : index
    %118 = memref.load %arg4[%c0_62, %c1_63] : memref<1x2xf32, #tpu.memory_space<smem>>
    %119 = vector.broadcast %118 : f32 to vector<8x128xf32>
    %120 = arith.mulf %119, %114 : vector<8x128xf32>
    %121 = arith.addf %117, %120 : vector<8x128xf32>
    %cst_64 = arith.constant 2.000000e+01 : f32
    %122 = vector.broadcast %cst_64 : f32 to vector<8x128xf32>
    %123 = arith.cmpf ogt, %121, %122 : vector<8x128xf32>
    %cst_65 = arith.constant 2.000000e+01 : f32
    %124 = vector.broadcast %cst_65 : f32 to vector<8x128xf32>
    %125 = arith.minimumf %121, %124 : vector<8x128xf32>
    %126 = math.exp %125 : vector<8x128xf32>
    %127 = math.log1p %126 : vector<8x128xf32>
    %128 = arith.select %123, %121, %127 : vector<8x128xi1>, vector<8x128xf32>
    %c0_66 = arith.constant 0 : index
    %c0_67 = arith.constant 0 : index
    %129 = vector.load %arg7[%c0_66, %c0_67] : memref<8x128xf32, #tpu.memory_space<vmem>>, vector<8x128xf32>
    tpu.vector_store %arg7[%c0_66, %c0_67], %128 {strides = array<i32>} : memref<8x128xf32, #tpu.memory_space<vmem>>, vector<8x128xf32>,
    return
  }
  func.func @transform_0(%arg0: i32) -> (i32, i32) {
    %c0_i32 = arith.constant 0 : i32
    %c0_i32_0 = arith.constant 0 : i32
    %c0_i32_1 = arith.constant 0 : i32
    return %c0_i32, %c0_i32_0 : i32, i32
  }
  func.func @transform_1(%arg0: i32) -> (i32, i32) {
    %c0_i32 = arith.constant 0 : i32
    %c0_i32_0 = arith.constant 0 : i32
    %c0_i32_1 = arith.constant 0 : i32
    return %c0_i32, %c0_i32_0 : i32, i32
  }
  func.func @transform_2(%arg0: i32) -> (i32, i32) {
    %c0_i32 = arith.constant 0 : i32
    %c0_i32_0 = arith.constant 0 : i32
    %c0_i32_1 = arith.constant 0 : i32
    return %c0_i32, %c0_i32_0 : i32, i32
  }
  func.func @transform_3(%arg0: i32) -> (i32, i32) {
    %c0_i32 = arith.constant 0 : i32
    %c0_i32_0 = arith.constant 0 : i32
    %c0_i32_1 = arith.constant 0 : i32
    return %c0_i32, %c0_i32_0 : i32, i32
  }
  func.func @transform_4(%arg0: i32) -> (i32, i32) {
    %c0_i32 = arith.constant 0 : i32
    %c0_i32_0 = arith.constant 0 : i32
    return %arg0, %c0_i32 : i32, i32
  }
  func.func @transform_5(%arg0: i32) -> (i32, i32) {
    %c0_i32 = arith.constant 0 : i32
    %c0_i32_0 = arith.constant 0 : i32
    return %arg0, %c0_i32 : i32, i32
  }
  func.func @transform_6(%arg0: i32) -> (i32, i32) {
    %c0_i32 = arith.constant 0 : i32
    %c0_i32_0 = arith.constant 0 : i32
    return %arg0, %c0_i32 : i32, i32
  }
}

</mosaic_0001>

<llo_original>
// kernel: tpu_custom_call.1
$region0: #{tpu_custom_call.1}
  #allocation0 [shape = 'u32[]', space=smem, size = 0x4, offset = 0x4, fixed_abs, tag = 'smem constant byte address 0x4 - core index']
  #allocation1 [shape = 'u32[144,128]{1,0:T(1,128)}', space=vmem, size = 0x12000, scoped, tag = 'internal scratch']
  %s0 = inlined_call_operand.vmem [shape: f32[4,2], index: 0, kind: input, shape index: {}]
  %s1 = inlined_call_operand.vmem [shape: f32[3,4], index: 1, kind: input, shape index: {}]
  %s2 = inlined_call_operand.hbm [shape: f32[2,3], index: 2, kind: input, shape index: {}]
  %s3 = inlined_call_operand.vmem [shape: f32[1,2], index: 3, kind: input, shape index: {}]
  %s4 = inlined_call_operand.vmem [shape: f32[8,128], index: 4, kind: input, shape index: {}]
  %s5 = inlined_call_operand.hbm [shape: f32[8,128], index: 5, kind: input, shape index: {}]
  %s6 = inlined_call_operand.hbm [shape: f32[8,128], index: 6, kind: output, shape index: {}]
  %s7 = sld [smem:[#allocation0]]
  $region54: #{tpu_custom_call.1} parent=0
    _
  %s9 = ssub.s32 1, %s7
  %s10 = scalar_select 0, %s9, %s7
  $region1: #{tpu_custom_call.1} parent=0
    #allocation2 [shape = 'u8[2048]{0}', space=smem, size = 0x800, scoped, tag = 'input window, operand 0, single buffered']
    #allocation3 [shape = 's32[1]{0}', space=sflag, size = 0x4, scoped, tag = 'scoped memory for tpu_custom_call.1']
    #allocation4 [shape = 's32[1]{0}', space=sflag, size = 0x4, scoped, tag = 'scoped memory for tpu_custom_call.1']
    #allocation5 [shape = 's32[1]{0}', space=sflag, size = 0x4, scoped, tag = 'scoped memory for tpu_custom_call.1']
    #allocation6 [shape = 's32[1]{0}', space=sflag, size = 0x4, scoped, tag = 'scoped memory for tpu_custom_call.1']
    #allocation7 [shape = 'u8[2048]{0}', space=smem, size = 0x800, scoped, tag = 'input window, operand 1, single buffered']
    #allocation8 [shape = 's32[1]{0}', space=sflag, size = 0x4, scoped, tag = 'scoped memory for tpu_custom_call.1']
    #allocation9 [shape = 'u8[1024]{0}', space=smem, size = 0x400, scoped, tag = 'input window, operand 2, single buffered']
    #allocation10 [shape = 'u8[512]{0}', space=smem, size = 0x200, scoped, tag = 'input window, operand 3, single buffered']
    #allocation11 [shape = 'u8[4096]{0}', space=vmem, size = 0x1000, scoped, tag = 'input window, operand 5, single buffered']
    #allocation12 [shape = 'u8[4096]{0}', space=vmem, size = 0x1000, scoped, tag = 'output window, operand 0, single buffered']
    %11 = vsyncpa [#allocation6], 0
    %12 = vsyncpa [#allocation8], 0
    %13 = vsyncpa [#allocation5], 0
    %14 = vsyncpa [#allocation3], 0
    %15 = vsyncpa [#allocation4], 0
    // Predicated region
    $region2: #{tpu_custom_call.1} parent=1 // pred_check
      _
    $region3: #{tpu_custom_call.1} parent=1 // pred_check_branch
      %17 = sbr.rel (0) target = $region5
    $region4: #{tpu_custom_call.1} parent=1 // pred_region
      %s19 = ssub.s32 64, 64
      %20 = vsyncadd [#allocation6], %s19
      %s22 = sshll.u32 %s0, 4
      %s23 = int_to_ptr.vmem [resolvable:$true] %s22
      %25 = dma.vmem_to_smem %s23, 64, [#allocation2], [#allocation6]
    $region5: #{tpu_custom_call.1} parent=1 // pred_fallthru
      _
    // Predicated region
    $region6: #{tpu_custom_call.1} parent=1 // pred_check
      _
    $region7: #{tpu_custom_call.1} parent=1 // pred_check_branch
      %27 = sbr.rel (0) target = $region9
    $region8: #{tpu_custom_call.1} parent=1 // pred_region
      %s29 = ssub.s32 64, 64
      %30 = vsyncadd [#allocation8], %s29
      %s32 = sshll.u32 %s1, 4
      %s33 = int_to_ptr.vmem [resolvable:$true] %s32
      %35 = dma.vmem_to_smem %s33, 64, [#allocation7], [#allocation8]
    $region9: #{tpu_custom_call.1} parent=1 // pred_fallthru
      _
    // Predicated region
    $region10: #{tpu_custom_call.1} parent=1 // pred_check
      _
    $region11: #{tpu_custom_call.1} parent=1 // pred_check_branch
      %37 = sbr.rel (0) target = $region13
    $region12: #{tpu_custom_call.1} parent=1 // pred_region
      %s39 = ssub.s32 32, 32
      %40 = vsyncadd [#allocation5], %s39
      %43 = dma.hbm_to_smem %s2, 32, [#allocation9], [#allocation5]
    $region13: #{tpu_custom_call.1} parent=1 // pred_fallthru
      _
    // Predicated region
    $region14: #{tpu_custom_call.1} parent=1 // pred_check
      _
    $region15: #{tpu_custom_call.1} parent=1 // pred_check_branch
      %45 = sbr.rel (0) target = $region17
    $region16: #{tpu_custom_call.1} parent=1 // pred_region
      %s47 = ssub.s32 16, 16
      %48 = vsyncadd [#allocation8], %s47
      %s50 = sshll.u32 %s3, 4
      %s51 = int_to_ptr.vmem [resolvable:$true] %s50
      %53 = dma.vmem_to_smem %s51, 16, [#allocation10], [#allocation8]
    $region17: #{tpu_custom_call.1} parent=1 // pred_fallthru
      _
    // Predicated region
    $region18: #{tpu_custom_call.1} parent=1 // pred_check
      _
    $region19: #{tpu_custom_call.1} parent=1 // pred_check_branch
      %55 = sbr.rel (0) target = $region21
    $region20: #{tpu_custom_call.1} parent=1 // pred_region
      _
    $region21: #{tpu_custom_call.1} parent=1 // pred_fallthru
      _
    // Predicated region
    $region22: #{tpu_custom_call.1} parent=1 // pred_check
      _
    $region23: #{tpu_custom_call.1} parent=1 // pred_check_branch
      %57 = sbr.rel (0) target = $region25
    $region24: #{tpu_custom_call.1} parent=1 // pred_region
      %s59 = ssub.s32 128, 128
      %60 = vsyncadd [#allocation3], %s59
      %s62 = sshll.u32 [#allocation11], 4
      %s63 = int_to_ptr.vmem [resolvable:$true] %s62
      %65 = dma.hbm_to_vmem [thread:$0]  %s5, 128, %s63, [#allocation3]
    $region25: #{tpu_custom_call.1} parent=1 // pred_fallthru
      _
    // Predicated region
    $region26: #{tpu_custom_call.1} parent=1 // pred_check
      _
    $region27: #{tpu_custom_call.1} parent=1 // pred_check_branch
      %67 = sbr.rel (0) target = $region29
    $region28: #{tpu_custom_call.1} parent=1 // pred_region
      %68 = dma.done [#allocation6], 64
    $region29: #{tpu_custom_call.1} parent=1 // pred_fallthru
      _
    // Predicated region
    $region30: #{tpu_custom_call.1} parent=1 // pred_check
      _
    $region31: #{tpu_custom_call.1} parent=1 // pred_check_branch
      %70 = sbr.rel (0) target = $region33
    $region32: #{tpu_custom_call.1} parent=1 // pred_region
      %71 = dma.done [#allocation8], 64
    $region33: #{tpu_custom_call.1} parent=1 // pred_fallthru
      _
    // Predicated region
    $region34: #{tpu_custom_call.1} parent=1 // pred_check
      _
    $region35: #{tpu_custom_call.1} parent=1 // pred_check_branch
      %73 = sbr.rel (0) target = $region37
    $region36: #{tpu_custom_call.1} parent=1 // pred_region
      %74 = dma.done [#allocation5], 32
    $region37: #{tpu_custom_call.1} parent=1 // pred_fallthru
      _
    // Predicated region
    $region38: #{tpu_custom_call.1} parent=1 // pred_check
      _
    $region39: #{tpu_custom_call.1} parent=1 // pred_check_branch
      %76 = sbr.rel (0) target = $region41
    $region40: #{tpu_custom_call.1} parent=1 // pred_region
      %77 = dma.done [#allocation8], 16
    $region41: #{tpu_custom_call.1} parent=1 // pred_fallthru
      _
    // Predicated region
    $region42: #{tpu_custom_call.1} parent=1 // pred_check
      _
    $region43: #{tpu_custom_call.1} parent=1 // pred_check_branch
      %79 = sbr.rel (0) target = $region45
    $region44: #{tpu_custom_call.1} parent=1 // pred_region
      %80 = dma.done [#allocation3], 128
    $region45: #{tpu_custom_call.1} parent=1 // pred_fallthru
      _
    %81 = sfence
    %v82 = vld [vmem:[%s4] sm:$0xff]
    %v83 = vld [vmem:[#allocation11] sm:$0xff]
    %s84 = sld [smem:[#allocation2]]
    %v85 = vstv %s84
    %v86 = vmul.f32 %v85, %v82
    %s87 = sld [smem:[#allocation2 + $0x1]]
    %v88 = vstv %s87
    %v89 = vmul.f32 %v88, %v83
    %v90 = vadd.f32 %v86, %v89
    %v91 = vmax.f32 %v90, 0.0
    %s92 = sld [smem:[#allocation2 + $0x80]]
    %v93 = vstv %s92
    %v94 = vmul.f32 %v93, %v82
    %s95 = sld [smem:[#allocation2 + $0x81]]
    %v96 = vstv %s95
    %v97 = vmul.f32 %v96, %v83
    %v98 = vadd.f32 %v94, %v97
    %v99 = vmax.f32 %v98, 0.0
    %s100 = sld [smem:[#allocation2 + $0x100]]
    %v101 = vstv %s100
    %v102 = vmul.f32 %v101, %v82
    %s103 = sld [smem:[#allocation2 + $0x101]]
    %v104 = vstv %s103
    %v105 = vmul.f32 %v104, %v83
    %v106 = vadd.f32 %v102, %v105
    %v107 = vmax.f32 %v106, 0.0
    %s108 = sld [smem:[#allocation2 + $0x180]]
    %v109 = vstv %s108
    %v110 = vmul.f32 %v109, %v82
    %s111 = sld [smem:[#allocation2 + $0x181]]
    %v112 = vstv %s111
    %v113 = vmul.f32 %v112, %v83
    %v114 = vadd.f32 %v110, %v113
    %v115 = vmax.f32 %v114, 0.0
    %s116 = sld [smem:[#allocation7]]
    %v117 = vstv %s116
    %v118 = vmul.f32 %v117, %v91
    %s119 = sld [smem:[#allocation7 + $0x1]]
    %v120 = vstv %s119
    %v121 = vmul.f32 %v120, %v99
    %v122 = vadd.f32 %v118, %v121
    %s123 = sld [smem:[#allocation7 + $0x2]]
    %v124 = vstv %s123
    %v125 = vmul.f32 %v124, %v107
    %v126 = vadd.f32 %v122, %v125
    %s127 = sld [smem:[#allocation7 + $0x3]]
    %v128 = vstv %s127
    %v129 = vmul.f32 %v128, %v115
    %v130 = vadd.f32 %v126, %v129
    %v131 = vmax.f32 %v130, 0.0
    %s132 = sld [smem:[#allocation7 + $0x80]]
    %v133 = vstv %s132
    %v134 = vmul.f32 %v133, %v91
    %s135 = sld [smem:[#allocation7 + $0x81]]
    %v136 = vstv %s135
    %v137 = vmul.f32 %v136, %v99
    %v138 = vadd.f32 %v134, %v137
    %s139 = sld [smem:[#allocation7 + $0x82]]
    %v140 = vstv %s139
    %v141 = vmul.f32 %v140, %v107
    %v142 = vadd.f32 %v138, %v141
    %s143 = sld [smem:[#allocation7 + $0x83]]
    %v144 = vstv %s143
    %v145 = vmul.f32 %v144, %v115
    %v146 = vadd.f32 %v142, %v145
    %v147 = vmax.f32 %v146, 0.0
    %s148 = sld [smem:[#allocation7 + $0x100]]
    %v149 = vstv %s148
    %v150 = vmul.f32 %v149, %v91
    %s151 = sld [smem:[#allocation7 + $0x101]]
    %v152 = vstv %s151
    %v153 = vmul.f32 %v152, %v99
    %v154 = vadd.f32 %v150, %v153
    %s155 = sld [smem:[#allocation7 + $0x102]]
    %v156 = vstv %s155
    %v157 = vmul.f32 %v156, %v107
    %v158 = vadd.f32 %v154, %v157
    %s159 = sld [smem:[#allocation7 + $0x103]]
    %v160 = vstv %s159
    %v161 = vmul.f32 %v160, %v115
    %v162 = vadd.f32 %v158, %v161
    %v163 = vmax.f32 %v162, 0.0
    %s164 = sld [smem:[#allocation9]]
    %v165 = vstv %s164
    %v166 = vmul.f32 %v165, %v131
    %s167 = sld [smem:[#allocation9 + $0x1]]
    %v168 = vstv %s167
    %v169 = vmul.f32 %v168, %v147
    %v170 = vadd.f32 %v166, %v169
    %s171 = sld [smem:[#allocation9 + $0x2]]
    %v172 = vstv %s171
    %v173 = vmul.f32 %v172, %v163
    %v174 = vadd.f32 %v170, %v173
    %v175 = vmax.f32 %v174, 0.0
    %s176 = sld [smem:[#allocation9 + $0x80]]
    %v177 = vstv %s176
    %v178 = vmul.f32 %v177, %v131
    %s179 = sld [smem:[#allocation9 + $0x81]]
    %v180 = vstv %s179
    %v181 = vmul.f32 %v180, %v147
    %v182 = vadd.f32 %v178, %v181
    %s183 = sld [smem:[#allocation9 + $0x82]]
    %v184 = vstv %s183
    %v185 = vmul.f32 %v184, %v163
    %v186 = vadd.f32 %v182, %v185
    %v187 = vmax.f32 %v186, 0.0
    %s188 = sld [smem:[#allocation10]]
    %v189 = vstv %s188
    %v190 = vmul.f32 %v189, %v175
    %s191 = sld [smem:[#allocation10 + $0x1]]
    %v192 = vstv %s191
    %v193 = vmul.f32 %v192, %v187
    %v194 = vadd.f32 %v190, %v193
    %vm195 = vcmp.gt.f32.partialorder %v194, 20.0
    %v196 = vmin.f32 %v194, 20.0
    %v197 = vmul.f32 %v196, 1.442695
    %v198 = vpow.pop %v197
    %v199 = vadd.f32 %v198, 1.0
    %v200 = vlog2.pop %v199
    %v201 = vmul.f32 %v200, 0.6931472
    %v202 = vmul.f32 -0.5, %v198
    %v203 = vadd.f32 %v202, 1.0
    %v204 = vmul.f32 %v203, %v198
    %v205 = vand.u32 2147483647, %v198
    %vm206 = vcmp.lt.f32.partialorder %v205, 0.0004427343
    %v207 = vsel %vm206, %v204, %v201
    %v208 = vsel %vm195, %v194, %v207
    %209 = vst [vmem:[#allocation12] sm:$0xff] %v208
    // Predicated region
    $region46: #{tpu_custom_call.1} parent=1 // pred_check
      _
    $region47: #{tpu_custom_call.1} parent=1 // pred_check_branch
      %211 = sbr.rel (0) target = $region49
    $region48: #{tpu_custom_call.1} parent=1 // pred_region
      %s213 = ssub.s32 128, 128
      %214 = vsyncadd [#allocation4], %s213
      %s216 = sshll.u32 [#allocation12], 4
      %s217 = int_to_ptr.vmem [resolvable:$true] %s216
      %219 = dma.vmem_to_hbm [thread:$0]  %s217, 128, %s6, [#allocation4]
    $region49: #{tpu_custom_call.1} parent=1 // pred_fallthru
      _
    // Predicated region
    $region50: #{tpu_custom_call.1} parent=1 // pred_check
      _
    $region51: #{tpu_custom_call.1} parent=1 // pred_check_branch
      %221 = sbr.rel (0) target = $region53
    $region52: #{tpu_custom_call.1} parent=1 // pred_region
      %222 = dma.done [#allocation4], 128
    $region53: #{tpu_custom_call.1} parent=1 // pred_fallthru
      _
    %223 = vsyncpa [#allocation3], 1
    %224 = vsyncpa [#allocation4], 1
    %225 = vsyncpa [#allocation5], 1
    %226 = vsyncpa [#allocation6], 1
    %227 = vsyncpa [#allocation8], 1

</llo_original>
